<compile_context>
chip_gen: v5e
topology: v5e:2x2
jax: 0.10.0
libtpu: 0.0.40
codegen_flags: <defaults>
</compile_context>

<pallas_src>
import functools

import jax
import jax.numpy as jnp
from jax import lax
from jax.experimental import pallas as pl
from jax.experimental.pallas import tpu as pltpu

NEG_SLOPE = 0.2


def _leaky_relu(x):
    return jnp.where(x > 0, x, NEG_SLOPE * x)


def _residual_stack_kernel(x_ref, halo_ref, w1_ref, b1_ref, w2s_ref, b2s_ref,
                           o_ref, *, K, dilation, pad, t_tile):
    # x_ref   : (1, C, t_tile)       original (un-padded) input tile, f32
    # halo_ref: (1, 1, C, 2*pad)     [left pad cols | right pad cols], f32
    # w1_ref  : (C, K*C)             dilated conv, taps fused, bf16
    # b1_ref  : (C, 1)               f32
    # w2s_ref : (C, 2*C)             [stack 1x1 | skip 1x1] fused, bf16
    # b2s_ref : (C, 1)               b2 + b_skip, f32
    # o_ref   : (1, C, t_tile)
    x_t = x_ref[0]                                    # (C, t_tile) f32
    halo = halo_ref[0, 0]                             # (C, 2*pad)  f32

    # Reflection-padded window for this tile (halo supplied by the wrapper).
    window = jnp.concatenate([halo[:, :pad], x_t, halo[:, pad:]], axis=-1)

    # LeakyReLU commutes with reflection padding; cast once for the MXU.
    xact = _leaky_relu(window).astype(jnp.bfloat16)   # (C, t_tile + 2*pad)

    # Fuse the K dilated taps into a single (K*C)-deep matmul operand.
    # (Built once per tile; the unaligned lane slices run on the XLU slot.)
    taps = jnp.concatenate(
        [xact[:, t * dilation:t * dilation + t_tile] for t in range(K)], axis=0)
    h = jnp.dot(w1_ref[...], taps, preferred_element_type=jnp.float32)
    h = _leaky_relu(h + b1_ref[...])

    # Fuse stack 1x1 conv and skip 1x1 conv into one 2C-deep matmul.
    op2 = jnp.concatenate([h.astype(jnp.bfloat16), x_t.astype(jnp.bfloat16)],
                          axis=0)                     # (2C, t_tile)
    out = jnp.dot(w2s_ref[...], op2, preferred_element_type=jnp.float32)
    out = out + b2s_ref[...]

    o_ref[0] = out.astype(o_ref.dtype)


def residual_stack(x, w1, b1, w2, b2, ws, bs, *, kernel_size, dilation,
                   t_tile=512):
    """x: (B, C, T) f32. w1: (K, C_out, C_in); w2/ws: (C_out, C_in).

    Returns (B, C, T), matching the PyTorch ResidualStack forward.
    """
    B, C, T = x.shape
    K = kernel_size
    # TODO(synk): kernel_size == 1 (pad == 0) path not needed for MelGAN defaults.
    assert (K - 1) % 2 == 0 and K >= 3, "kernel_size must be odd and >= 3"
    pad = (K - 1) // 2 * dilation
    assert T > pad, "reflection padding requires T > pad"

    # Time-tile: multiple of 128 lanes, bounded by the (rounded-up) sequence.
    # These tiles keep VMEM use well under the v7x 32 MiB scoped default.
    t_tile = max(128, (min(t_tile, -(-T // 128) * 128) // 128) * 128)
    num_tiles = -(-T // t_tile)
    Tr = num_tiles * t_tile
    if Tr > T and Tr - T < pad:      # guarantee >= pad valid cols past T
        num_tiles += 1
        Tr = num_tiles * t_tile

    # Right reflection columns: x[T-2], x[T-3], ..., x[T-1-pad].
    right_reflect = x[:, :, T - 1 - pad:T - 1][..., ::-1]          # (B, C, pad)
    if Tr == T:
        x_work = x                      # no extra full-array HBM copy
    else:
        # Ragged fallback: positions [T, T+pad) hold the reflection so interior
        # reads that straddle T stay correct; the rest is never used.
        tail = jnp.zeros((B, C, Tr - T - pad), x.dtype)
        x_work = jnp.concatenate([x, right_reflect, tail], axis=-1)

    # Per-tile halos (B, num_tiles, C, 2*pad): [left pad cols | right pad cols].
    left_reflect = x[:, :, 1:pad + 1][..., ::-1]                   # (B, C, pad)
    halo_list = []
    for j in range(num_tiles):
        left = left_reflect if j == 0 else x_work[:, :, j * t_tile - pad:j * t_tile]
        if j == num_tiles - 1:
            right = right_reflect if Tr == T else jnp.zeros_like(right_reflect)
        else:
            right = x_work[:, :, (j + 1) * t_tile:(j + 1) * t_tile + pad]
        halo_list.append(jnp.concatenate([left, right], axis=-1))
    halos = jnp.stack(halo_list, axis=1)                           # (B,nt,C,2p)

    # Weight prep: fuse taps / fuse stack+skip 1x1, bf16 for the MXU.
    w1f = jnp.transpose(w1, (1, 0, 2)).reshape(C, K * C).astype(jnp.bfloat16)
    w2s = jnp.concatenate([w2, ws], axis=1).astype(jnp.bfloat16)   # (C, 2C)
    b1c = b1.reshape(C, 1).astype(jnp.float32)
    b2sc = (b2 + bs).reshape(C, 1).astype(jnp.float32)

    kern = functools.partial(_residual_stack_kernel,
                             K=K, dilation=dilation, pad=pad, t_tile=t_tile)

    out = pl.pallas_call(
        kern,
        out_shape=jax.ShapeDtypeStruct((B, C, Tr), x.dtype),
        grid_spec=pltpu.PrefetchScalarGridSpec(
            num_scalar_prefetch=0,
            grid=(B, num_tiles),
            in_specs=[
                pl.BlockSpec((1, C, t_tile), lambda b, j: (b, 0, j)),
                pl.BlockSpec((1, 1, C, 2 * pad), lambda b, j: (b, j, 0, 0)),
                pl.BlockSpec((C, K * C), lambda b, j: (0, 0)),
                pl.BlockSpec((C, 1), lambda b, j: (0, 0)),
                pl.BlockSpec((C, 2 * C), lambda b, j: (0, 0)),
                pl.BlockSpec((C, 1), lambda b, j: (0, 0)),
            ],
            out_specs=pl.BlockSpec((1, C, t_tile), lambda b, j: (b, 0, j)),
        ),
        compiler_params=pltpu.CompilerParams(
            dimension_semantics=("parallel", "parallel")),
    )(x_work, halos, w1f, b1c, w2s, b2sc)

    return out[:, :, :T] if Tr > T else out


def residual_stack_ref(x, w1, b1, w2, b2, ws, bs, *, kernel_size, dilation):
    """Pure-JAX f32 reference mirroring the PyTorch module (NCL layout)."""
    pad = (kernel_size - 1) // 2 * dilation
    h = _leaky_relu(x)
    h = jnp.pad(h, ((0, 0), (0, 0), (pad, pad)), mode="reflect")
    # w1 is (K, C_out, C_in) -> torch Conv1d weight layout is (C_out, C_in, K)
    w1_torch = jnp.transpose(w1, (1, 2, 0))
    h = lax.conv_general_dilated(
        h, w1_torch, window_strides=(1,), padding="VALID",
        rhs_dilation=(dilation,),
        dimension_numbers=("NCH", "OIH", "NCH")) + b1[None, :, None]
    h = _leaky_relu(h)
    h = jnp.einsum("oi,bit->bot", w2, h) + b2[None, :, None]
    skip = jnp.einsum("oi,bit->bot", ws, x) + bs[None, :, None]
    return h + skip


if __name__ == "__main__":
    def run_case(B, C, T, kernel_size, dilation, t_tile, key):
        kx, k1, kb1, k2, kb2, ks, kbs = jax.random.split(key, 7)
        x = jax.random.normal(kx, (B, C, T), jnp.float32)
        # Deterministic synthetic parameters (std=0.02, matching _init_weights style).
        w1 = 0.02 * jax.random.normal(k1, (kernel_size, C, C), jnp.float32)  # (K, out, in)
        b1 = 0.02 * jax.random.normal(kb1, (C,), jnp.float32)
        w2 = 0.02 * jax.random.normal(k2, (C, C), jnp.float32)               # (out, in)
        b2 = 0.02 * jax.random.normal(kb2, (C,), jnp.float32)
        ws = 0.02 * jax.random.normal(ks, (C, C), jnp.float32)
        bs = 0.02 * jax.random.normal(kbs, (C,), jnp.float32)

        out = residual_stack(x, w1, b1, w2, b2, ws, bs,
                             kernel_size=kernel_size, dilation=dilation,
                             t_tile=t_tile)
        out = jax.block_until_ready(out)

        ref = residual_stack_ref(x, w1, b1, w2, b2, ws, bs,
                                 kernel_size=kernel_size, dilation=dilation)
        assert out.shape == (B, C, T)
        # bf16 MXU operands vs f32 reference -> relaxed tolerance.
        err = float(jnp.max(jnp.abs(out - ref)))
        assert jnp.allclose(out, ref, atol=2e-2, rtol=2e-2), \
            f"mismatch vs JAX reference (max abs err {err})"

    key = jax.random.PRNGKey(0)
    k_a, k_b = jax.random.split(key)
    # 3 time tiles, dilation 1 (pad=1): exercises left/interior/right halos.
    run_case(2, 32, 384, 3, 1, 128, k_a)
    # 2 time tiles, dilation 3 (pad=3): exercises dilated taps + wider halo.
    run_case(2, 32, 256, 3, 3, 128, k_b)

    print("KERNEL_OK")
</pallas_src>

<mosaic_0001>
module attributes {stable_mosaic.version = 11 : i64} {
  func.func @_residual_stack_kernel(%arg0: i32, %arg1: i32, %arg2: memref<1x32x128xf32, #tpu.memory_space<vmem>>, %arg3: memref<1x1x32x2xf32, #tpu.memory_space<vmem>>, %arg4: memref<32x96xbf16, #tpu.memory_space<vmem>>, %arg5: memref<32x1xf32, #tpu.memory_space<vmem>>, %arg6: memref<32x64xbf16, #tpu.memory_space<vmem>>, %arg7: memref<32x1xf32, #tpu.memory_space<vmem>>, %arg8: memref<1x32x128xf32, #tpu.memory_space<vmem>>) attributes {dimension_semantics = [#tpu.dimension_semantics<parallel>, #tpu.dimension_semantics<parallel>], iteration_bounds = array<i64: 2, 3>, scalar_prefetch = 0 : i64, scratch_operands = 0 : i64, tpu.core_type = #tpu.core_type<tc>, window_params = [{transform_indices = @transform_0, window_bounds = array<i64: 1, 32, 128>}, {transform_indices = @transform_1, window_bounds = array<i64: 1, 1, 32, 2>}, {pipeline_mode = #tpu.pipeline_mode<synchronous>, transform_indices = @transform_2, window_bounds = array<i64: 32, 96>}, {pipeline_mode = #tpu.pipeline_mode<synchronous>, transform_indices = @transform_3, window_bounds = array<i64: 32, 1>}, {pipeline_mode = #tpu.pipeline_mode<synchronous>, transform_indices = @transform_4, window_bounds = array<i64: 32, 64>}, {pipeline_mode = #tpu.pipeline_mode<synchronous>, transform_indices = @transform_5, window_bounds = array<i64: 32, 1>}, {transform_indices = @transform_6, window_bounds = array<i64: 1, 32, 128>}]} {
    %c0 = arith.constant 0 : index
    %c0_0 = arith.constant 0 : index
    %c0_1 = arith.constant 0 : index
    %0 = vector.load %arg2[%c0, %c0_0, %c0_1] : memref<1x32x128xf32, #tpu.memory_space<vmem>>, vector<1x32x128xf32>
    %1 = vector.shape_cast %0 : vector<1x32x128xf32> to vector<32x128xf32>
    %c0_2 = arith.constant 0 : index
    %c0_3 = arith.constant 0 : index
    %c0_4 = arith.constant 0 : index
    %c0_5 = arith.constant 0 : index
    %2 = vector.load %arg3[%c0_2, %c0_3, %c0_4, %c0_5] : memref<1x1x32x2xf32, #tpu.memory_space<vmem>>, vector<1x1x32x2xf32>
    %3 = vector.shape_cast %2 : vector<1x1x32x2xf32> to vector<32x2xf32>
    %4 = vector.extract_strided_slice %3 {offsets = [0, 0], sizes = [32, 1], strides = [1, 1]} : vector<32x2xf32> to vector<32x1xf32>
    %5 = vector.extract_strided_slice %3 {offsets = [0, 1], sizes = [32, 1], strides = [1, 1]} : vector<32x2xf32> to vector<32x1xf32>
    %6 = tpu.concatenate %4, %1, %5 in 1 : vector<32x1xf32>, vector<32x128xf32>, vector<32x1xf32> -> vector<32x130xf32>
    %cst = arith.constant 0.000000e+00 : f32
    %7 = vector.broadcast %cst : f32 to vector<32x130xf32>
    %8 = arith.cmpf ogt, %6, %7 : vector<32x130xf32>
    %cst_6 = arith.constant 2.000000e-01 : f32
    %9 = vector.broadcast %cst_6 : f32 to vector<32x130xf32>
    %10 = arith.mulf %9, %6 : vector<32x130xf32>
    %11 = arith.select %8, %6, %10 : vector<32x130xi1>, vector<32x130xf32>
    %12 = arith.truncf %11 : vector<32x130xf32> to vector<32x130xbf16>
    %13 = vector.extract_strided_slice %12 {offsets = [0, 0], sizes = [32, 128], strides = [1, 1]} : vector<32x130xbf16> to vector<32x128xbf16>
    %14 = vector.extract_strided_slice %12 {offsets = [0, 1], sizes = [32, 128], strides = [1, 1]} : vector<32x130xbf16> to vector<32x128xbf16>
    %15 = vector.extract_strided_slice %12 {offsets = [0, 2], sizes = [32, 128], strides = [1, 1]} : vector<32x130xbf16> to vector<32x128xbf16>
    %16 = tpu.concatenate %13, %14, %15 in 0 : vector<32x128xbf16>, vector<32x128xbf16>, vector<32x128xbf16> -> vector<96x128xbf16>
    %c0_7 = arith.constant 0 : index
    %c0_8 = arith.constant 0 : index
    %17 = vector.load %arg4[%c0_7, %c0_8] : memref<32x96xbf16, #tpu.memory_space<vmem>>, vector<32x96xbf16>
    %cst_9 = arith.constant dense<0.000000e+00> : vector<32x128xf32>
    %18 = tpu.matmul %17, %16, %cst_9 {dimension_numbers = #tpu.dot_dimension_numbers<[1], [0], [0], [1], [0, 0, 1, 1], [], []>} : vector<32x96xbf16>, vector<96x128xbf16>, vector<32x128xf32> -> vector<32x128xf32>
    %c0_10 = arith.constant 0 : index
    %c0_11 = arith.constant 0 : index
    %19 = vector.load %arg5[%c0_10, %c0_11] : memref<32x1xf32, #tpu.memory_space<vmem>>, vector<32x1xf32>
    %20 = vector.broadcast %19 : vector<32x1xf32> to vector<32x128xf32>
    %21 = arith.addf %18, %20 : vector<32x128xf32>
    %cst_12 = arith.constant 0.000000e+00 : f32
    %22 = vector.broadcast %cst_12 : f32 to vector<32x128xf32>
    %23 = arith.cmpf ogt, %21, %22 : vector<32x128xf32>
    %cst_13 = arith.constant 2.000000e-01 : f32
    %24 = vector.broadcast %cst_13 : f32 to vector<32x128xf32>
    %25 = arith.mulf %24, %21 : vector<32x128xf32>
    %26 = arith.select %23, %21, %25 : vector<32x128xi1>, vector<32x128xf32>
    %27 = arith.truncf %26 : vector<32x128xf32> to vector<32x128xbf16>
    %28 = arith.truncf %1 : vector<32x128xf32> to vector<32x128xbf16>
    %29 = tpu.concatenate %27, %28 in 0 : vector<32x128xbf16>, vector<32x128xbf16> -> vector<64x128xbf16>
    %c0_14 = arith.constant 0 : index
    %c0_15 = arith.constant 0 : index
    %30 = vector.load %arg6[%c0_14, %c0_15] : memref<32x64xbf16, #tpu.memory_space<vmem>>, vector<32x64xbf16>
    %cst_16 = arith.constant dense<0.000000e+00> : vector<32x128xf32>
    %31 = tpu.matmul %30, %29, %cst_16 {dimension_numbers = #tpu.dot_dimension_numbers<[1], [0], [0], [1], [0, 0, 1, 1], [], []>} : vector<32x64xbf16>, vector<64x128xbf16>, vector<32x128xf32> -> vector<32x128xf32>
    %c0_17 = arith.constant 0 : index
    %c0_18 = arith.constant 0 : index
    %32 = vector.load %arg7[%c0_17, %c0_18] : memref<32x1xf32, #tpu.memory_space<vmem>>, vector<32x1xf32>
    %33 = vector.broadcast %32 : vector<32x1xf32> to vector<32x128xf32>
    %34 = arith.addf %31, %33 : vector<32x128xf32>
    %c0_19 = arith.constant 0 : index
    %c0_20 = arith.constant 0 : index
    %c0_21 = arith.constant 0 : index
    %35 = vector.load %arg8[%c0_19, %c0_20, %c0_21] : memref<1x32x128xf32, #tpu.memory_space<vmem>>, vector<1x32x128xf32>
    %36 = vector.shape_cast %35 : vector<1x32x128xf32> to vector<32x128xf32>
    %37 = vector.shape_cast %34 : vector<32x128xf32> to vector<1x32x128xf32>
    tpu.vector_store %arg8[%c0_19, %c0_20, %c0_21], %37 {strides = array<i32>} : memref<1x32x128xf32, #tpu.memory_space<vmem>>, vector<1x32x128xf32>,
    return
  }
  func.func @transform_0(%arg0: i32, %arg1: i32) -> (i32, i32, i32) {
    %c0_i32 = arith.constant 0 : i32
    %c0_i32_0 = arith.constant 0 : i32
    return %arg0, %c0_i32, %arg1 : i32, i32, i32
  }
  func.func @transform_1(%arg0: i32, %arg1: i32) -> (i32, i32, i32, i32) {
    %c0_i32 = arith.constant 0 : i32
    %c0_i32_0 = arith.constant 0 : i32
    %c0_i32_1 = arith.constant 0 : i32
    return %arg0, %arg1, %c0_i32, %c0_i32_0 : i32, i32, i32, i32
  }
  func.func @transform_2(%arg0: i32, %arg1: i32) -> (i32, i32) {
    %c0_i32 = arith.constant 0 : i32
    %c0_i32_0 = arith.constant 0 : i32
    %c0_i32_1 = arith.constant 0 : i32
    return %c0_i32, %c0_i32_0 : i32, i32
  }
  func.func @transform_3(%arg0: i32, %arg1: i32) -> (i32, i32) {
    %c0_i32 = arith.constant 0 : i32
    %c0_i32_0 = arith.constant 0 : i32
    %c0_i32_1 = arith.constant 0 : i32
    return %c0_i32, %c0_i32_0 : i32, i32
  }
  func.func @transform_4(%arg0: i32, %arg1: i32) -> (i32, i32) {
    %c0_i32 = arith.constant 0 : i32
    %c0_i32_0 = arith.constant 0 : i32
    %c0_i32_1 = arith.constant 0 : i32
    return %c0_i32, %c0_i32_0 : i32, i32
  }
  func.func @transform_5(%arg0: i32, %arg1: i32) -> (i32, i32) {
    %c0_i32 = arith.constant 0 : i32
    %c0_i32_0 = arith.constant 0 : i32
    %c0_i32_1 = arith.constant 0 : i32
    return %c0_i32, %c0_i32_0 : i32, i32
  }
  func.func @transform_6(%arg0: i32, %arg1: i32) -> (i32, i32, i32) {
    %c0_i32 = arith.constant 0 : i32
    %c0_i32_0 = arith.constant 0 : i32
    return %arg0, %c0_i32, %arg1 : i32, i32, i32
  }
}

</mosaic_0001>

<llo_original>
// kernel: tpu_custom_call.1
$region0: #{tpu_custom_call.1}
  #allocation0 [shape = 'u32[]', space=smem, size = 0x4, offset = 0x4, fixed_abs, tag = 'smem constant byte address 0x4 - core index']
  #allocation1 [shape = 'u32[72,128]{1,0:T(1,128)}', space=vmem, size = 0x9000, scoped, tag = 'internal scratch']
  %s0 = inlined_call_operand.vmem [shape: f32[2,32,384], index: 0, kind: input, shape index: {}]
  %s1 = inlined_call_operand.vmem [shape: f32[2,3,32,2], index: 1, kind: input, shape index: {}]
  %s2 = inlined_call_operand.vmem [shape: bf16[32,96], index: 2, kind: input, shape index: {}]
  %s3 = inlined_call_operand.vmem [shape: f32[32,1], index: 3, kind: input, shape index: {}]
  %s4 = inlined_call_operand.vmem [shape: bf16[32,64], index: 4, kind: input, shape index: {}]
  %s5 = inlined_call_operand.vmem [shape: f32[32,1], index: 5, kind: input, shape index: {}]
  %s6 = inlined_call_operand.hbm [shape: f32[2,32,384], index: 6, kind: output, shape index: {}]
  %s7 = sld [smem:[#allocation0]]
  $region95: #{tpu_custom_call.1} parent=0
    _
  %s9 = ssub.s32 1, %s7
  %s10 = scalar_select 0, %s9, %s7
  $region1: #{tpu_custom_call.1} parent=0
    #allocation2 [shape = 'u8[32768]{0}', space=vmem, size = 0x8000, scoped, tag = 'input window, operand 0']
    #allocation3 [shape = 'u8[32768]{0}', space=vmem, size = 0x8000, scoped, tag = 'output window, operand 0']
    #allocation4 [shape = 's32[2]{0}', space=sflag, size = 0x8, scoped, tag = 'scoped memory for tpu_custom_call.1']
    %11 = vsyncpa [#allocation4], 0
    %s12 = scalar_lea.sflag [#allocation4], 1
    %13 = vsyncpa %s12, 0
    loop: start=0, step=1, limit=8
    $region2: #{tpu_custom_call.1} parent=1 // loop_pre_header
      _
    $region3: #{tpu_custom_call.1} parent=1 // loop_header
      %s15 = sphi 0, %s19
      %p16 = scmp.ge.s32.totalorder %s15, 8
      %s22 = sphi 0, %s34
      %s23 = sphi 0, %s30
      %s24 = sphi 0, %s22
      %s25 = sphi 0, %s23
      %s26 = sphi 0, %s24
      %s27 = sphi 0, %s25
      %s39 = sphi 0, %s41
      %s42 = sphi 0, %s39
      %s43 = sphi 0, %s42
      %s59 = sphi 0, %s43
      %s67 = sphi 0, %s69
      %s70 = sphi 0, %s67
      %s71 = sphi 0, %s70
      %s87 = sphi 0, %s71
      %s91 = sphi 0, %s91
      %s93 = sphi 0, %s91
      %s94 = sphi 0, %s93
      %s108 = sphi 0, %s94
      %s112 = sphi 0, %s112
      %s114 = sphi 0, %s112
      %s115 = sphi 0, %s114
      %s129 = sphi 0, %s115
      %s133 = sphi 0, %s133
      %s135 = sphi 0, %s133
      %s136 = sphi 0, %s135
      %s150 = sphi 0, %s136
      %s154 = sphi 0, %s154
      %s156 = sphi 0, %s154
      %s157 = sphi 0, %s156
      %s171 = sphi 0, %s157
      %s179 = sphi 0, %s181
      %s182 = sphi 0, %s179
      %s183 = sphi 0, %s182
      %s199 = sphi 0, %s183
    $region4: #{tpu_custom_call.1} parent=1 // loop_header_branch
      %18 = sbr.rel (%p16) target = $region8
    $region5: #{tpu_custom_call.1} parent=1 // loop_body
      %s20 = ssub.s32 %s15, 1
      %s21 = ssub.s32 %s15, 2
      %s28 = sadd.s32 1, %s23
      %p29 = scmp.ge.s32.totalorder %s28, 3
      %s30 = scalar_select %p29, 0, %s28
      %s31 = sadd.s32 1, %s22
      %s32 = scalar_select %p29, %s31, %s22
      %p33 = scmp.ge.s32.totalorder %s32, 2
      %s34 = scalar_select %p33, 0, %s32
      %s35 = ssub.s32 %s22, %s34
      %s36 = ssub.s32 %s23, %s30
      %s37 = sor.u32 %s35, %s36
      %p38 = scmp.eq.s32.totalorder %s37, 0
      %s40 = sadd.s32 %s39, 1
      %s41 = scalar_select %p38, %s39, %s40
      %p44 = pneg %p38
      %p45 = scmp.eq.s32.totalorder %s15, 5
      %p46 = por %p44, %p45
      %p47 = scmp.ne.s32.totalorder %s39, %s42
      %p48 = scmp.eq.s32.totalorder %s15, 0
      %p49 = por %p47, %p48
      %p50 = scmp.ne.s32.totalorder %s39, %s42
      %p51 = scmp.eq.s32.totalorder %s20, 5
      %p52 = por %p50, %p51
      %p53 = scmp.ne.s32.totalorder %s42, %s43
      %p54 = scmp.eq.s32.totalorder %s20, 0
      %p55 = por %p53, %p54
      %p56 = scmp.ne.s32.totalorder %s42, %s43
      %p57 = scmp.eq.s32.totalorder %s21, 5
      %p58 = por %p56, %p57
      %p60 = scmp.ne.s32.totalorder %s43, %s59
      %p61 = scmp.eq.s32.totalorder %s21, 0
      %p62 = por %p60, %p61
      %s63 = ssub.s32 %s22, %s34
      %s64 = ssub.s32 %s23, %s30
      %s65 = sor.u32 %s63, %s64
      %p66 = scmp.eq.s32.totalorder %s65, 0
      %s68 = sadd.s32 %s67, 1
      %s69 = scalar_select %p66, %s67, %s68
      %p72 = pneg %p66
      %p73 = scmp.eq.s32.totalorder %s15, 5
      %p74 = por %p72, %p73
      %p75 = scmp.ne.s32.totalorder %s67, %s70
      %p76 = scmp.eq.s32.totalorder %s15, 0
      %p77 = por %p75, %p76
      %p78 = scmp.ne.s32.totalorder %s67, %s70
      %p79 = scmp.eq.s32.totalorder %s20, 5
      %p80 = por %p78, %p79
      %p81 = scmp.ne.s32.totalorder %s70, %s71
      %p82 = scmp.eq.s32.totalorder %s20, 0
      %p83 = por %p81, %p82
      %p84 = scmp.ne.s32.totalorder %s70, %s71
      %p85 = scmp.eq.s32.totalorder %s21, 5
      %p86 = por %p84, %p85
      %p88 = scmp.ne.s32.totalorder %s71, %s87
      %p89 = scmp.eq.s32.totalorder %s21, 0
      %p90 = por %p88, %p89
      %s92 = sadd.s32 %s91, 1
      %p95 = scmp.eq.s32.totalorder %s15, 5
      %p96 = scmp.ne.s32.totalorder %s91, %s93
      %p97 = scmp.eq.s32.totalorder %s15, 0
      %p98 = por %p96, %p97
      %p99 = scmp.ne.s32.totalorder %s91, %s93
      %p100 = scmp.eq.s32.totalorder %s20, 5
      %p101 = por %p99, %p100
      %p102 = scmp.ne.s32.totalorder %s93, %s94
      %p103 = scmp.eq.s32.totalorder %s20, 0
      %p104 = por %p102, %p103
      %p105 = scmp.ne.s32.totalorder %s93, %s94
      %p106 = scmp.eq.s32.totalorder %s21, 5
      %p107 = por %p105, %p106
      %p109 = scmp.ne.s32.totalorder %s94, %s108
      %p110 = scmp.eq.s32.totalorder %s21, 0
      %p111 = por %p109, %p110
      %s113 = sadd.s32 %s112, 1
      %p116 = scmp.eq.s32.totalorder %s15, 5
      %p117 = scmp.ne.s32.totalorder %s112, %s114
      %p118 = scmp.eq.s32.totalorder %s15, 0
      %p119 = por %p117, %p118
      %p120 = scmp.ne.s32.totalorder %s112, %s114
      %p121 = scmp.eq.s32.totalorder %s20, 5
      %p122 = por %p120, %p121
      %p123 = scmp.ne.s32.totalorder %s114, %s115
      %p124 = scmp.eq.s32.totalorder %s20, 0
      %p125 = por %p123, %p124
      %p126 = scmp.ne.s32.totalorder %s114, %s115
      %p127 = scmp.eq.s32.totalorder %s21, 5
      %p128 = por %p126, %p127
      %p130 = scmp.ne.s32.totalorder %s115, %s129
      %p131 = scmp.eq.s32.totalorder %s21, 0
      %p132 = por %p130, %p131
      %s134 = sadd.s32 %s133, 1
      %p137 = scmp.eq.s32.totalorder %s15, 5
      %p138 = scmp.ne.s32.totalorder %s133, %s135
      %p139 = scmp.eq.s32.totalorder %s15, 0
      %p140 = por %p138, %p139
      %p141 = scmp.ne.s32.totalorder %s133, %s135
      %p142 = scmp.eq.s32.totalorder %s20, 5
      %p143 = por %p141, %p142
      %p144 = scmp.ne.s32.totalorder %s135, %s136
      %p145 = scmp.eq.s32.totalorder %s20, 0
      %p146 = por %p144, %p145
      %p147 = scmp.ne.s32.totalorder %s135, %s136
      %p148 = scmp.eq.s32.totalorder %s21, 5
      %p149 = por %p147, %p148
      %p151 = scmp.ne.s32.totalorder %s136, %s150
      %p152 = scmp.eq.s32.totalorder %s21, 0
      %p153 = por %p151, %p152
      %s155 = sadd.s32 %s154, 1
      %p158 = scmp.eq.s32.totalorder %s15, 5
      %p159 = scmp.ne.s32.totalorder %s154, %s156
      %p160 = scmp.eq.s32.totalorder %s15, 0
      %p161 = por %p159, %p160
      %p162 = scmp.ne.s32.totalorder %s154, %s156
      %p163 = scmp.eq.s32.totalorder %s20, 5
      %p164 = por %p162, %p163
      %p165 = scmp.ne.s32.totalorder %s156, %s157
      %p166 = scmp.eq.s32.totalorder %s20, 0
      %p167 = por %p165, %p166
      %p168 = scmp.ne.s32.totalorder %s156, %s157
      %p169 = scmp.eq.s32.totalorder %s21, 5
      %p170 = por %p168, %p169
      %p172 = scmp.ne.s32.totalorder %s157, %s171
      %p173 = scmp.eq.s32.totalorder %s21, 0
      %p174 = por %p172, %p173
      %s175 = ssub.s32 %s22, %s34
      %s176 = ssub.s32 %s23, %s30
      %s177 = sor.u32 %s175, %s176
      %p178 = scmp.eq.s32.totalorder %s177, 0
      %s180 = sadd.s32 %s179, 1
      %s181 = scalar_select %p178, %s179, %s180
      %p184 = pneg %p178
      %p185 = scmp.eq.s32.totalorder %s15, 5
      %p186 = por %p184, %p185
      %p187 = scmp.ne.s32.totalorder %s179, %s182
      %p188 = scmp.eq.s32.totalorder %s15, 0
      %p189 = por %p187, %p188
      %p190 = scmp.ne.s32.totalorder %s179, %s182
      %p191 = scmp.eq.s32.totalorder %s20, 5
      %p192 = por %p190, %p191
      %p193 = scmp.ne.s32.totalorder %s182, %s183
      %p194 = scmp.eq.s32.totalorder %s20, 0
      %p195 = por %p193, %p194
      %p196 = scmp.ne.s32.totalorder %s182, %s183
      %p197 = scmp.eq.s32.totalorder %s21, 5
      %p198 = por %p196, %p197
      %p200 = scmp.ne.s32.totalorder %s183, %s199
      %p201 = scmp.eq.s32.totalorder %s21, 0
      %p202 = por %p200, %p201
      %p203 = scmp.le.s32.totalorder 1, %s15
      %p204 = scmp.lt.s32.totalorder %s15, 7
      %p205 = pnand %p203, %p204
      %p206 = pneg %p205
      // Predicated region
      $region9: #{tpu_custom_call.1} parent=5 // pred_check
        _
      $region10: #{tpu_custom_call.1} parent=5 // pred_check_branch
        %208 = sbr.rel (%p205) target = $region12
      $region11: #{tpu_custom_call.1} parent=5 // pred_region
        %s209 = ssub.s32 %s15, 1
        // Predicated region
        $region13: #{tpu_custom_call.1} parent=11 // pred_check
          %p210 = pneg %p104
        $region14: #{tpu_custom_call.1} parent=11 // pred_check_branch
          %212 = sbr.rel (%p210) target = $region16
        $region15: #{tpu_custom_call.1} parent=11 // pred_region
          _
        $region16: #{tpu_custom_call.1} parent=11 // pred_fallthru
          _
        // Predicated region
        $region17: #{tpu_custom_call.1} parent=11 // pred_check
          %p213 = pneg %p125
        $region18: #{tpu_custom_call.1} parent=11 // pred_check_branch
          %215 = sbr.rel (%p213) target = $region20
        $region19: #{tpu_custom_call.1} parent=11 // pred_region
          _
        $region20: #{tpu_custom_call.1} parent=11 // pred_fallthru
          _
        // Predicated region
        $region21: #{tpu_custom_call.1} parent=11 // pred_check
          %p216 = pneg %p146
        $region22: #{tpu_custom_call.1} parent=11 // pred_check_branch
          %218 = sbr.rel (%p216) target = $region24
        $region23: #{tpu_custom_call.1} parent=11 // pred_region
          _
        $region24: #{tpu_custom_call.1} parent=11 // pred_fallthru
          _
        // Predicated region
        $region25: #{tpu_custom_call.1} parent=11 // pred_check
          %p219 = pneg %p167
        $region26: #{tpu_custom_call.1} parent=11 // pred_check_branch
          %221 = sbr.rel (%p219) target = $region28
        $region27: #{tpu_custom_call.1} parent=11 // pred_region
          _
        $region28: #{tpu_custom_call.1} parent=11 // pred_fallthru
          _
      $region12: #{tpu_custom_call.1} parent=5 // pred_fallthru
        _
      %p222 = scmp.lt.s32.totalorder %s15, 6
      // Predicated region
      $region29: #{tpu_custom_call.1} parent=5 // pred_check
        %p223 = pneg %p222
      $region30: #{tpu_custom_call.1} parent=5 // pred_check_branch
        %225 = sbr.rel (%p223) target = $region32
      $region31: #{tpu_custom_call.1} parent=5 // pred_region
        // Predicated region
        $region33: #{tpu_custom_call.1} parent=31 // pred_check
          %p226 = pneg %p49
        $region34: #{tpu_custom_call.1} parent=31 // pred_check_branch
          %228 = sbr.rel (%p226) target = $region36
        $region35: #{tpu_custom_call.1} parent=31 // pred_region
          %s229 = sand.u32 %s39, 1
          %s230 = sand.u32 %s39, 1
          %s231 = smul.addr %s230, 32
          %s232 = scalar_lea.vmem [#allocation2], %s231
          %s233 = smul.addr %s22, 12
          %s234 = sadd.s32 %s23, %s233
          %s235 = smul.addr %s234, 8
          %s236 = scalar_lea.vmem %s0, %s235
          // Predicated region
          $region37: #{tpu_custom_call.1} parent=35 // pred_check
            _
          $region38: #{tpu_custom_call.1} parent=35 // pred_check_branch
            %238 = sbr.rel (0) target = $region40
          $region39: #{tpu_custom_call.1} parent=35 // pred_region
            // Predicated region
            $region41: #{tpu_custom_call.1} parent=39 // pred_check
              _
            $region42: #{tpu_custom_call.1} parent=39 // pred_check_branch
              %240 = sbr.rel (0) target = $region44
            $region43: #{tpu_custom_call.1} parent=39 // pred_region
              // Predicated region
              $region56: #{tpu_custom_call.1} parent=43 // pred_check
                _
              $region57: #{tpu_custom_call.1} parent=43 // pred_check_branch
                %262 = sbr.rel (0) target = $region59
              $region58: #{tpu_custom_call.1} parent=43 // pred_region
                loop: start=0, step=1, limit=1
                $region60: #{tpu_custom_call.1} parent=58 // loop_pre_header
                  _
                $region61: #{tpu_custom_call.1} parent=58 // loop_header
                  %s264 = sphi 0, %s268
                  %p265 = scmp.ge.s32.totalorder %s264, 1
                  %s269 = sphi %s236, %s236
                  %s270 = sphi %s232, %s232
                $region62: #{tpu_custom_call.1} parent=58 // loop_header_branch
                  %267 = sbr.rel (%p265) target = $region66
                $region63: #{tpu_custom_call.1} parent=58 // loop_body
                  %v271 = vld [vmem:[%s269] sm:$0xff]
                  %272 = vst [vmem:[%s270] sm:$0xff] %v271
                  %v273 = vld [vmem:[%s269 + $0x18] sm:$0xff]
                  %274 = vst [vmem:[%s270 + $0x8] sm:$0xff] %v273
                  %v275 = vld [vmem:[%s269 + $0x30] sm:$0xff]
                  %276 = vst [vmem:[%s270 + $0x10] sm:$0xff] %v275
                  %v277 = vld [vmem:[%s269 + $0x48] sm:$0xff]
                  %278 = vst [vmem:[%s270 + $0x18] sm:$0xff] %v277
                $region64: #{tpu_custom_call.1} parent=58 // loop_footer
                  %s268 = sadd.s32 1, %s264
                $region65: #{tpu_custom_call.1} parent=58 // loop_footer_branch
                  %263 = sbr.rel target = $region61
                $region66: #{tpu_custom_call.1} parent=58 // loop_exit
                  _
              $region59: #{tpu_custom_call.1} parent=43 // pred_fallthru
                _
              // Predicated region
              $region67: #{tpu_custom_call.1} parent=43 // pred_check
                _
              $region68: #{tpu_custom_call.1} parent=43 // pred_check_branch
                %280 = sbr.rel target = $region70
              $region69: #{tpu_custom_call.1} parent=43 // pred_region
                _
              $region70: #{tpu_custom_call.1} parent=43 // pred_fallthru
                _
            $region44: #{tpu_custom_call.1} parent=39 // pred_fallthru
              _
            // Predicated region
            $region45: #{tpu_custom_call.1} parent=39 // pred_check
              _
            $region46: #{tpu_custom_call.1} parent=39 // pred_check_branch
              %242 = sbr.rel target = $region48
            $region47: #{tpu_custom_call.1} parent=39 // pred_region
              %s244 = ssub.s32 256, 1
              loop: start=0, step=1, limit=1
              $region49: #{tpu_custom_call.1} parent=47 // loop_pre_header
                _
              $region50: #{tpu_custom_call.1} parent=47 // loop_header
                %s246 = sphi 0, %s250
                %p247 = scmp.ge.s32.totalorder %s246, 1
                %s251 = sphi %s236, %s236
                %s252 = sphi %s232, %s232
              $region51: #{tpu_custom_call.1} parent=47 // loop_header_branch
                %249 = sbr.rel (%p247) target = $region55
              $region52: #{tpu_custom_call.1} parent=47 // loop_body
                %v253 = vld [vmem:[%s251] sm:%s244]
                %254 = vst [vmem:[%s252] sm:%s244] %v253
                %v255 = vld [vmem:[%s251 + $0x18] sm:%s244]
                %256 = vst [vmem:[%s252 + $0x8] sm:%s244] %v255
                %v257 = vld [vmem:[%s251 + $0x30] sm:%s244]
                %258 = vst [vmem:[%s252 + $0x10] sm:%s244] %v257
                %v259 = vld [vmem:[%s251 + $0x48] sm:%s244]
                %260 = vst [vmem:[%s252 + $0x18] sm:%s244] %v259
              $region53: #{tpu_custom_call.1} parent=47 // loop_footer
                %s250 = sadd.s32 1, %s246
              $region54: #{tpu_custom_call.1} parent=47 // loop_footer_branch
                %245 = sbr.rel target = $region50
              $region55: #{tpu_custom_call.1} parent=47 // loop_exit
                _
            $region48: #{tpu_custom_call.1} parent=39 // pred_fallthru
              _
          $region40: #{tpu_custom_call.1} parent=35 // pred_fallthru
            _
          %281 = vnop
        $region36: #{tpu_custom_call.1} parent=31 // pred_fallthru
          _
        // Predicated region
        $region71: #{tpu_custom_call.1} parent=31 // pred_check
          %p282 = pneg %p77
        $region72: #{tpu_custom_call.1} parent=31 // pred_check_branch
          %284 = sbr.rel (%p282) target = $region74
        $region73: #{tpu_custom_call.1} parent=31 // pred_region
          %p285 = scmp.lt.s32.totalorder %s22, 1
          %s286 = scalar_select %p285, %s22, 1
          %p287 = scmp.lt.s32.totalorder %s23, 2
          %s288 = scalar_select %p287, %s23, 2
          %s289 = smul.addr %s288, 4
          %s290 = smul.addr %s286, 12
          %s291 = sadd.s32 %s289, %s290
          %s292 = smul.addr %s291, 8
          %s293 = scalar_lea.vmem %s1, %s292
        $region74: #{tpu_custom_call.1} parent=31 // pred_fallthru
          _
      $region32: #{tpu_custom_call.1} parent=5 // pred_fallthru
        _
      %p294 = scmp.le.s32.totalorder 1, %s15
      %p295 = scmp.lt.s32.totalorder %s15, 7
      %p296 = pnand %p294, %p295
      %p297 = pneg %p296
      // Predicated region
      $region75: #{tpu_custom_call.1} parent=5 // pred_check
        _
      $region76: #{tpu_custom_call.1} parent=5 // pred_check_branch
        %299 = sbr.rel (%p296) target = $region78
      $region77: #{tpu_custom_call.1} parent=5 // pred_region
        %s300 = ssub.s32 %s15, 1
        %s301 = sand.u32 %s42, 1
        %s302 = sand.u32 %s42, 1
        %s303 = smul.addr %s302, 32
        %s304 = scalar_lea.vmem [#allocation2], %s303
        // Predicated region
        $region79: #{tpu_custom_call.1} parent=77 // pred_check
          %p305 = pneg %p55
        $region80: #{tpu_custom_call.1} parent=77 // pred_check_branch
          %307 = sbr.rel (%p305) target = $region82
        $region81: #{tpu_custom_call.1} parent=77 // pred_region
          _
        $region82: #{tpu_custom_call.1} parent=77 // pred_fallthru
          _
        %s308 = sand.u32 %s42, 1
        %s309 = sand.u32 %s42, 1
        %s310 = smul.addr %s309, 32
        %s311 = scalar_lea.vmem [#allocation2], %s310
        %p312 = pneg %p55
        %p313 = pneg %p52
        %p314 = scmp.lt.s32.totalorder %s24, 1
        %s315 = scalar_select %p314, %s24, 1
        %p316 = scmp.lt.s32.totalorder %s25, 2
        %s317 = scalar_select %p316, %s25, 2
        %s318 = smul.addr %s317, 4
        %s319 = smul.addr %s315, 12
        %s320 = sadd.s32 %s318, %s319
        %s321 = smul.addr %s320, 8
        %s322 = scalar_lea.vmem %s1, %s321
        %p323 = pneg %p83
        %p324 = pneg %p80
        %p325 = pneg %p104
        %p326 = pneg %p101
        %p327 = pneg %p125
        %p328 = pneg %p122
        %p329 = pneg %p146
        %p330 = pneg %p143
        %p331 = pneg %p167
        %p332 = pneg %p164
        %p333 = pneg %p195
        %p334 = pneg %p192
        %s335 = sand.u32 %s182, 1
        %s336 = scalar_lea.sflag [#allocation4], %s335
        %s337 = sand.u32 %s182, 1
        %s338 = smul.addr %s337, 32
        %s339 = scalar_lea.vmem [#allocation3], %s338
        %p340 = scmp.lt.s32.totalorder %s24, 1
        %s341 = scalar_select %p340, %s24, 1
        %p342 = scmp.lt.s32.totalorder %s25, 2
        %s343 = scalar_select %p342, %s25, 2
        %s344 = smul.addr %s343, 4
        %s345 = smul.addr %s341, 12
        %s346 = sadd.s32 %s344, %s345
        %s347 = smul.addr %s346, 8
        %s348 = scalar_lea.vmem %s1, %s347
        %v350 = vld [vmem:[%s304] sm:$0xff]
        %v351 = vld [vmem:[%s304 + $0x8] sm:$0xff]
        %v352 = vld [vmem:[%s304 + $0x10] sm:$0xff]
        %v353 = vld [vmem:[%s304 + $0x18] sm:$0xff]
        %v354 = vld [vmem:[%s348] sm:$0xff]
        %v355 = vld [vmem:[%s348 + $0x8] sm:$0xff]
        %v356 = vld [vmem:[%s348 + $0x10] sm:$0xff]
        %v357 = vld [vmem:[%s348 + $0x18] sm:$0xff]
        %362 = vrot.lane.b32.xlu0 %v350, 1
        %v363 = vpop.permute.xlu0 %362
        %364 = vrot.lane.b32.xlu0 %v351, 1
        %v365 = vpop.permute.xlu0 %364
        %366 = vrot.lane.b32.xlu0 %v352, 1
        %v367 = vpop.permute.xlu0 %366
        %368 = vrot.lane.b32.xlu0 %v353, 1
        %v369 = vpop.permute.xlu0 %368
        %vm374 = vcmask 7168
        %v375 = vsel %vm374, %v354, %v363
        %v376 = vsel %vm374, %v355, %v365
        %v377 = vsel %vm374, %v356, %v367
        %v378 = vsel %vm374, %v357, %v369
        %v379 = vsel %vm374, %v363, %v354
        %v380 = vsel %vm374, %v365, %v355
        %v381 = vsel %vm374, %v367, %v356
        %v382 = vsel %vm374, %v369, %v357
        %vm383 = vcmp.gt.f32.partialorder %v375, 0.0
        %vm384 = vcmp.gt.f32.partialorder %v379, 0.0
        %vm385 = vcmp.gt.f32.partialorder %v376, 0.0
        %vm386 = vcmp.gt.f32.partialorder %v380, 0.0
        %vm387 = vcmp.gt.f32.partialorder %v377, 0.0
        %vm388 = vcmp.gt.f32.partialorder %v381, 0.0
        %vm389 = vcmp.gt.f32.partialorder %v378, 0.0
        %vm390 = vcmp.gt.f32.partialorder %v382, 0.0
        %v391 = vmul.f32 %v375, 0.2
        %v392 = vmul.f32 %v379, 0.2
        %v393 = vmul.f32 %v376, 0.2
        %v394 = vmul.f32 %v380, 0.2
        %v395 = vmul.f32 %v377, 0.2
        %v396 = vmul.f32 %v381, 0.2
        %v397 = vmul.f32 %v378, 0.2
        %v398 = vmul.f32 %v382, 0.2
        %v399 = vsel %vm383, %v375, %v391
        %v400 = vsel %vm384, %v379, %v392
        %v401 = vsel %vm385, %v376, %v393
        %v402 = vsel %vm386, %v380, %v394
        %v403 = vsel %vm387, %v377, %v395
        %v404 = vsel %vm388, %v381, %v396
        %v405 = vsel %vm389, %v378, %v397
        %v406 = vsel %vm390, %v382, %v398
        %v407 = vpack.c.bf16 %v400, %v399
        %v408 = vpack.c.bf16 %v402, %v401
        %v409 = vpack.c.bf16 %v404, %v403
        %v410 = vpack.c.bf16 %v406, %v405
        %v415 = vunpack.c.l.b16 %v407
        %v416 = vunpack.c.l.b16 %v408
        %v417 = vunpack.c.l.b16 %v409
        %v418 = vunpack.c.l.b16 %v410
        %v419 = vpack.c.b16 %v416, %v415
        %v420 = vpack.c.b16 %v418, %v417
        %v423 = vunpack.c.h.b16 %v407
        %v424 = vunpack.c.h.b16 %v408
        %v425 = vunpack.c.h.b16 %v409
        %v426 = vunpack.c.h.b16 %v410
        %v427 = vpack.c.b16 %v424, %v423
        %v428 = vpack.c.b16 %v426, %v425
        %429 = vrot.lane.b32.xlu0 %v419, 127
        %v430 = vpop.permute.xlu0 %429
        %431 = vrot.lane.b32.xlu0 %v427, 127
        %v432 = vpop.permute.xlu0 %431
        %433 = vrot.lane.b32.xlu0 %v420, 127
        %v434 = vpop.permute.xlu0 %433
        %435 = vrot.lane.b32.xlu0 %v428, 127
        %v436 = vpop.permute.xlu0 %435
        %vm437 = vcmask 1039360
        %v438 = vsel %vm437, %v430, %v432
        %v439 = vsel %vm437, %v434, %v436
        %442 = vrot.lane.b32.xlu0 %v419, 126
        %v443 = vpop.permute.xlu0 %442
        %444 = vrot.lane.b32.xlu0 %v427, 126
        %v445 = vpop.permute.xlu0 %444
        %446 = vrot.lane.b32.xlu0 %v420, 126
        %v447 = vpop.permute.xlu0 %446
        %448 = vrot.lane.b32.xlu0 %v428, 126
        %v449 = vpop.permute.xlu0 %448
        %vm450 = vcmask 1031168
        %v451 = vsel %vm450, %v443, %v445
        %v452 = vsel %vm450, %v447, %v449
        %v455 = vld [vmem:[%s2] sm:$0xf]
        %v456 = vld [vmem:[%s2 + $0x4] sm:$0xf]
        %v457 = vld [vmem:[%s2 + $0x8] sm:$0xf]
        %v458 = vld [vmem:[%s2 + $0xc] sm:$0xf]
        %v459 = vld [vmem:[%s3] sm:$0xff]
        %v460 = vld [vmem:[%s3 + $0x8] sm:$0xff]
        %v461 = vld [vmem:[%s3 + $0x10] sm:$0xff]
        %v462 = vld [vmem:[%s3 + $0x18] sm:$0xff]
        %464 = vset.pattern.permute.xlu0 0
        %465 = vperm.xlu0 %464, %v459
        %v466 = vpop.permute.xlu0 %465
        %469 = vset.pattern.permute.xlu0 0
        %470 = vperm.xlu0 %469, %v460
        %v471 = vpop.permute.xlu0 %470
        %474 = vset.pattern.permute.xlu0 0
        %475 = vperm.xlu0 %474, %v461
        %v476 = vpop.permute.xlu0 %475
        %479 = vset.pattern.permute.xlu0 0
        %480 = vperm.xlu0 %479, %v462
        %v481 = vpop.permute.xlu0 %480
        %v487 = vunpack.c.l.b16 %v455
        %v488 = vunpack.c.l.b16 %v456
        %v489 = vunpack.c.l.b16 %v457
        %v490 = vunpack.c.l.b16 %v458
        %v491 = vpack.c.b16 %v488, %v487
        %v492 = vpack.c.b16 %v490, %v489
        %vm493 = vcmask 785408
        %v495 = vsel %vm493, %v491, 0
        %v498 = vsel %vm493, %v492, 0
        %500 = vmatpush.bf16.msra.mxu0 0
        %501 = vmatpush.bf16.msra.mxu0 0
        %502 = vmatpush.bf16.msra.mxu0 %v452
        %503 = vmatpush.bf16.msra.mxu0 %v451
        %504 = vmatpush.bf16.msra.mxu0 %v439
        %505 = vmatpush.bf16.msra.mxu0 %v438
        %506 = vmatpush.bf16.msra.mxu0 %v420
        %507 = vmatpush.bf16.msra.mxu0 %v419
        %508 = vmatmul.bf16.gmra.mxu0 %v495
        %v509 = vpop.f32.mrf.mxu0
        %v510 = vadd.f32 %v466, %v509
        %v511 = vpop.f32.mrf.mxu0
        %v512 = vadd.f32 %v471, %v511
        %513 = vmatmul.bf16.gmra.mxu0 %v498
        %v514 = vpop.f32.mrf.mxu0
        %v515 = vadd.f32 %v476, %v514
        %v516 = vpop.f32.mrf.mxu0
        %v517 = vadd.f32 %v481, %v516
        %518 = vdwg.mxu0
        %vm519 = vcmp.gt.f32.partialorder %v510, 0.0
        %vm520 = vcmp.gt.f32.partialorder %v512, 0.0
        %vm521 = vcmp.gt.f32.partialorder %v515, 0.0
        %vm522 = vcmp.gt.f32.partialorder %v517, 0.0
        %v523 = vmul.f32 %v510, 0.2
        %v524 = vmul.f32 %v512, 0.2
        %v525 = vmul.f32 %v515, 0.2
        %v526 = vmul.f32 %v517, 0.2
        %v527 = vsel %vm519, %v510, %v523
        %v528 = vsel %vm520, %v512, %v524
        %v529 = vsel %vm521, %v515, %v525
        %v530 = vsel %vm522, %v517, %v526
        %v531 = vpack.c.bf16 %v527, %v527
        %v532 = vpack.c.bf16 %v528, %v528
        %v533 = vpack.c.bf16 %v529, %v529
        %v534 = vpack.c.bf16 %v530, %v530
        %v535 = vpack.c.bf16 %v350, %v350
        %v536 = vpack.c.bf16 %v351, %v351
        %v537 = vpack.c.bf16 %v352, %v352
        %v538 = vpack.c.bf16 %v353, %v353
        %v543 = vunpack.c.l.b16 %v531
        %v544 = vunpack.c.l.b16 %v532
        %v545 = vunpack.c.l.b16 %v533
        %v546 = vunpack.c.l.b16 %v534
        %v547 = vpack.c.b16 %v544, %v543
        %v548 = vpack.c.b16 %v546, %v545
        %v555 = vunpack.c.l.b16 %v535
        %v556 = vunpack.c.l.b16 %v536
        %v557 = vunpack.c.l.b16 %v537
        %v558 = vunpack.c.l.b16 %v538
        %v559 = vpack.c.b16 %v556, %v555
        %v560 = vpack.c.b16 %v558, %v557
        %v563 = vld [vmem:[%s4] sm:$0xf]
        %v564 = vld [vmem:[%s4 + $0x4] sm:$0xf]
        %v565 = vld [vmem:[%s4 + $0x8] sm:$0xf]
        %v566 = vld [vmem:[%s4 + $0xc] sm:$0xf]
        %v567 = vld [vmem:[%s5] sm:$0xff]
        %v568 = vld [vmem:[%s5 + $0x8] sm:$0xff]
        %v569 = vld [vmem:[%s5 + $0x10] sm:$0xff]
        %v570 = vld [vmem:[%s5 + $0x18] sm:$0xff]
        %572 = vset.pattern.permute.xlu0 0
        %573 = vperm.xlu0 %572, %v567
        %v574 = vpop.permute.xlu0 %573
        %577 = vset.pattern.permute.xlu0 0
        %578 = vperm.xlu0 %577, %v568
        %v579 = vpop.permute.xlu0 %578
        %582 = vset.pattern.permute.xlu0 0
        %583 = vperm.xlu0 %582, %v569
        %v584 = vpop.permute.xlu0 %583
        %587 = vset.pattern.permute.xlu0 0
        %588 = vperm.xlu0 %587, %v570
        %v589 = vpop.permute.xlu0 %588
        %v595 = vunpack.c.l.b16 %v563
        %v596 = vunpack.c.l.b16 %v564
        %v597 = vunpack.c.l.b16 %v565
        %v598 = vunpack.c.l.b16 %v566
        %v599 = vpack.c.b16 %v596, %v595
        %v600 = vpack.c.b16 %v598, %v597
        %vm601 = vcmask 523264
        %v603 = vsel %vm601, %v599, 0
        %v606 = vsel %vm601, %v600, 0
        %608 = vmatpush.bf16.msra.mxu0 0
        %609 = vmatpush.bf16.msra.mxu0 0
        %610 = vmatpush.bf16.msra.mxu0 0
        %611 = vmatpush.bf16.msra.mxu0 0
        %612 = vmatpush.bf16.msra.mxu0 %v560
        %613 = vmatpush.bf16.msra.mxu0 %v559
        %614 = vmatpush.bf16.msra.mxu0 %v548
        %615 = vmatpush.bf16.msra.mxu0 %v547
        %616 = vmatmul.bf16.gmra.mxu0 %v603
        %v617 = vpop.f32.mrf.mxu0
        %v618 = vadd.f32 %v574, %v617
        %v619 = vpop.f32.mrf.mxu0
        %v620 = vadd.f32 %v579, %v619
        %621 = vmatmul.bf16.gmra.mxu0 %v606
        %v622 = vpop.f32.mrf.mxu0
        %v623 = vadd.f32 %v584, %v622
        %v624 = vpop.f32.mrf.mxu0
        %v625 = vadd.f32 %v589, %v624
        %626 = vdwg.mxu0
        %627 = vst [vmem:[%s339] sm:$0xff] %v618
        %628 = vst [vmem:[%s339 + $0x8] sm:$0xff] %v620
        %629 = vst [vmem:[%s339 + $0x10] sm:$0xff] %v623
        %630 = vst [vmem:[%s339 + $0x18] sm:$0xff] %v625
        %s631 = sand.u32 %s182, 1
        %s632 = scalar_lea.sflag [#allocation4], %s631
        %s633 = sand.u32 %s182, 1
        %s634 = smul.addr %s633, 32
        %s635 = scalar_lea.vmem [#allocation3], %s634
        // Predicated region
        $region83: #{tpu_custom_call.1} parent=77 // pred_check
          %p636 = pneg %p192
        $region84: #{tpu_custom_call.1} parent=77 // pred_check_branch
          %638 = sbr.rel (%p636) target = $region86
        $region85: #{tpu_custom_call.1} parent=77 // pred_region
          %640 = vsyncadd %s632, 0
          %s641 = smul.addr %s24, 12
          %s642 = sadd.s32 %s25, %s641
          %s643 = smul.addr %s642, 8
          %s644 = scalar_lea.hbm %s6, %s643
          %s645 = sshll.u32 %s635, 4
          %s646 = int_to_ptr.vmem [resolvable:$true] %s645
          %s647 = sshll.u32 %s644, 4
          %s648 = int_to_ptr.hbm [resolvable:$true] %s647
          %653 = dma.vmem_to_hbm [thread:$0]  %s646, 512, %s648, %s632, 128, 384, 8
        $region86: #{tpu_custom_call.1} parent=77 // pred_fallthru
          _
      $region78: #{tpu_custom_call.1} parent=5 // pred_fallthru
        _
      %p654 = scmp.le.s32.totalorder 2, %s15
      // Predicated region
      $region87: #{tpu_custom_call.1} parent=5 // pred_check
        %p655 = pneg %p654
      $region88: #{tpu_custom_call.1} parent=5 // pred_check_branch
        %657 = sbr.rel (%p655) target = $region90
      $region89: #{tpu_custom_call.1} parent=5 // pred_region
        %s658 = ssub.s32 %s15, 2
        // Predicated region
        $region91: #{tpu_custom_call.1} parent=89 // pred_check
          %p659 = pneg %p198
        $region92: #{tpu_custom_call.1} parent=89 // pred_check_branch
          %661 = sbr.rel (%p659) target = $region94
        $region93: #{tpu_custom_call.1} parent=89 // pred_region
          %s662 = sand.u32 %s183, 1
          %s663 = scalar_lea.sflag [#allocation4], %s662
          %s664 = sand.u32 %s183, 1
          %s665 = smul.addr %s664, 32
          %s666 = scalar_lea.vmem [#allocation3], %s665
          %668 = dma.done %s663, 512
        $region94: #{tpu_custom_call.1} parent=89 // pred_fallthru
          _
      $region90: #{tpu_custom_call.1} parent=5 // pred_fallthru
        _
    $region6: #{tpu_custom_call.1} parent=1 // loop_footer
      %s19 = sadd.s32 1, %s15
    $region7: #{tpu_custom_call.1} parent=1 // loop_footer_branch
      %14 = sbr.rel target = $region3
    $region8: #{tpu_custom_call.1} parent=1 // loop_exit
      _
    %669 = vsyncpa [#allocation4], 1
    %s670 = scalar_lea.sflag [#allocation4], 1
    %671 = vsyncpa %s670, 1

</llo_original>
